<compile_context>
chip_gen: v6e
topology: v6e:2x2x1
jax: 0.10.0
libtpu: 0.0.40
codegen_flags: <defaults>
</compile_context>

<pallas_src>
import functools

import jax
import jax.numpy as jnp
from jax.experimental import pallas as pl
from jax.experimental.pallas import tpu as pltpu


def _make_divisible(v, divisor, min_value=None):
    if min_value is None:
        min_value = divisor
    new_v = max(min_value, int(v + divisor / 2) // divisor * divisor)
    if new_v < 0.9 * v:
        new_v += divisor
    return new_v


def _cdiv(a, b):
    return -(-a // b)


def _vmem_capacity_bytes():
    """Physical VMEM per core; conservative (v7x = 64 MiB) if the query fails."""
    try:
        info = pltpu.get_tpu_info()
        for attr in ("vmem_capacity_bytes", "vmem_size_bytes", "vmem_bytes"):
            v = getattr(info, attr, None)
            if v:
                return int(v)
    except Exception:
        pass
    return 64 * 1024 * 1024


def _pick_num_steps(B, bt_max, bytes_per_batch):
    """Smallest divisor of B whose batch tile fits bt_max.  Force >= 2 steps
    when B >= 2 (v7x has 2 TensorCores) and prefer an even step count when the
    resulting blocks stay >= ~1 MiB.  A divisor always exists (steps == B), so
    no batch padding is ever needed."""
    min_steps = _cdiv(B, max(1, bt_max))
    if B >= 2:
        min_steps = max(min_steps, 2)
    steps = min_steps
    while B % steps:
        steps += 1
    if steps % 2 and steps < B and B % 2 == 0:
        even_steps = 2 * steps            # divides B (B even, steps odd)
        if (B // even_steps) * bytes_per_batch >= (1 << 20):
            steps = even_steps
    return steps


# ----------------------------------------------------------------------------
# Main single-pass kernel: one (bt, C, HW) block per grid step.
# ----------------------------------------------------------------------------
def _se_kernel(x_ref, w1t_ref, b1_ref, w2t_ref, b2_ref, o_ref, *, inv_hw):
    # x_ref: (bt, C, HW) block covering bt batch elements; HW is the true
    # (unpadded) spatial size, so the mean is just sum * inv_hw.
    x = x_ref[...]                                               # input dtype

    # Squeeze: AdaptiveAvgPool2d(1) == sum over spatial / HW, accumulated f32.
    y = jnp.sum(x.astype(jnp.float32), axis=-1) * inv_hw        # (bt, C) f32

    # Excite: Linear(C -> hidden) + ReLU.  Weights are pre-cast f32.
    h = jnp.dot(y, w1t_ref[...], preferred_element_type=jnp.float32)
    h = jnp.maximum(h + b1_ref[...], 0.0)                       # (bt, hidden)

    # Linear(hidden -> C) + h_sigmoid = relu6(x + 3) / 6.
    s = jnp.dot(h, w2t_ref[...], preferred_element_type=jnp.float32)
    s = s + b2_ref[...]
    s = jnp.clip(s + 3.0, 0.0, 6.0) * (1.0 / 6.0)               # (bt, C) f32

    # Scale: multiply in the input dtype (no full-tile f32 copy held live).
    o_ref[...] = x * s.astype(o_ref.dtype)[:, :, None]


# ----------------------------------------------------------------------------
# Fallback kernels (spatial split) for the case where a single-batch block is
# too big for the VMEM budget: pass 1 pools, pass 2 does FC + scale.
# ----------------------------------------------------------------------------
def _pool_kernel(x_ref, sum_ref, *, hw, hw_tile, inv_hw):
    k = pl.program_id(1)

    @pl.when(k == 0)
    def _():
        sum_ref[...] = jnp.zeros_like(sum_ref)

    x = x_ref[...]                                               # (1, C, hw_tile)
    lane = jax.lax.broadcasted_iota(jnp.int32, x.shape, 2)
    valid = (k * hw_tile + lane) < hw                            # mask ragged tail
    xs = jnp.where(valid, x.astype(jnp.float32), 0.0)
    sum_ref[...] += jnp.sum(xs, axis=2)[:, None, :]              # (1, 1, C)

    @pl.when(k == pl.num_programs(1) - 1)
    def _():
        sum_ref[...] = sum_ref[...] * inv_hw                     # mean


def _se_scale_kernel(pooled_ref, w1t_ref, b1_ref, w2t_ref, b2_ref, x_ref,
                     o_ref, s_ref):
    k = pl.program_id(1)

    @pl.when(k == 0)
    def _():
        y = pooled_ref[...][:, 0, :]                             # (1, C) f32
        h = jnp.dot(y, w1t_ref[...], preferred_element_type=jnp.float32)
        h = jnp.maximum(h + b1_ref[...], 0.0)
        s = jnp.dot(h, w2t_ref[...], preferred_element_type=jnp.float32)
        s = s + b2_ref[...]
        s_ref[...] = jnp.clip(s + 3.0, 0.0, 6.0) * (1.0 / 6.0)   # (1, C) f32

    x = x_ref[...]                                               # (1, C, hw_tile)
    o_ref[...] = x * s_ref[...].astype(o_ref.dtype)[:, :, None]


def _se_spatial_split(x_flat, w1t, b1_2d, w2t, b2_2d, *, target_block_bytes,
                      vmem_limit):
    B, C, HW = x_flat.shape
    itemsize = jnp.dtype(x_flat.dtype).itemsize
    hidden = w1t.shape[1]

    hw_tile = (target_block_bytes // (C * itemsize)) // 128 * 128
    hw_tile = max(128, hw_tile)
    if hw_tile >= HW:
        hw_tile = HW                                  # full dim (exempt)
    n_k = _cdiv(HW, hw_tile)

    pooled = pl.pallas_call(
        functools.partial(_pool_kernel, hw=HW, hw_tile=hw_tile,
                          inv_hw=1.0 / float(HW)),
        out_shape=jax.ShapeDtypeStruct((B, 1, C), jnp.float32),
        grid_spec=pltpu.PrefetchScalarGridSpec(
            num_scalar_prefetch=0,
            grid=(B, n_k),
            in_specs=[pl.BlockSpec((1, C, hw_tile), lambda b, k: (b, 0, k))],
            out_specs=pl.BlockSpec((1, 1, C), lambda b, k: (b, 0, 0)),
        ),
        compiler_params=pltpu.CompilerParams(
            dimension_semantics=("parallel", "arbitrary"),
            vmem_limit_bytes=vmem_limit,
        ),
    )(x_flat)

    out_flat = pl.pallas_call(
        _se_scale_kernel,
        out_shape=jax.ShapeDtypeStruct((B, C, HW), x_flat.dtype),
        grid_spec=pltpu.PrefetchScalarGridSpec(
            num_scalar_prefetch=0,
            grid=(B, n_k),
            in_specs=[
                pl.BlockSpec((1, 1, C), lambda b, k: (b, 0, 0)),       # pooled
                pl.BlockSpec((C, hidden), lambda b, k: (0, 0)),        # w1^T
                pl.BlockSpec((1, hidden), lambda b, k: (0, 0)),        # b1
                pl.BlockSpec((hidden, C), lambda b, k: (0, 0)),        # w2^T
                pl.BlockSpec((1, C), lambda b, k: (0, 0)),             # b2
                pl.BlockSpec((1, C, hw_tile), lambda b, k: (b, 0, k)), # x chunk
            ],
            out_specs=pl.BlockSpec((1, C, hw_tile), lambda b, k: (b, 0, k)),
            scratch_shapes=[pltpu.VMEM((1, C), jnp.float32)],
        ),
        compiler_params=pltpu.CompilerParams(
            dimension_semantics=("parallel", "arbitrary"),
            vmem_limit_bytes=vmem_limit,
        ),
    )(pooled, w1t, b1_2d, w2t, b2_2d, x_flat)
    return out_flat


# ----------------------------------------------------------------------------
# Wrapper
# ----------------------------------------------------------------------------
def se_layer(x, w1, b1, w2, b2, *, max_block_bytes=None):
    """x: [B, C, H, W] NCHW.  w1: [hidden, C], b1: [hidden], w2: [C, hidden], b2: [C]."""
    B, C, H, W = x.shape
    hidden = w1.shape[0]
    HW = H * W
    itemsize = jnp.dtype(x.dtype).itemsize

    # Per-generation budgets.  Worst-case live VMEM per step is roughly
    # 2*in + 2*out double buffers + one transient f32 copy of the block
    # (from the pooling sum's cast) = 4*T + T*4/itemsize, which stays below
    # vmem_limit for both the 128-MiB (v5e/v6e) and 64-MiB (v7x) cases.
    vmem_cap = _vmem_capacity_bytes()
    vmem_limit = min((vmem_cap * 3) // 4, 96 * 1024 * 1024)
    target_block_bytes = max(2 * 1024 * 1024, min(vmem_cap // 10, 16 * 1024 * 1024))
    if max_block_bytes is not None:
        target_block_bytes = int(max_block_bytes)

    # Pure metadata reshape: no pad, no copy, no output slice.
    x_flat = x.reshape(B, C, HW)

    # Pre-transpose + pre-cast params once (no per-step converts in kernel).
    w1t = jnp.transpose(w1).astype(jnp.float32)          # [C, hidden]
    w2t = jnp.transpose(w2).astype(jnp.float32)          # [hidden, C]
    b1_2d = b1.reshape(1, hidden).astype(jnp.float32)
    b2_2d = b2.reshape(1, C).astype(jnp.float32)

    bytes_per_batch = C * HW * itemsize

    if bytes_per_batch > target_block_bytes:
        # Oversized single-batch block: split HW instead of blowing VMEM.
        out_flat = _se_spatial_split(x_flat, w1t, b1_2d, w2t, b2_2d,
                                     target_block_bytes=target_block_bytes,
                                     vmem_limit=vmem_limit)
        return out_flat.reshape(B, C, H, W)

    bt_max = min(B, max(1, target_block_bytes // bytes_per_batch))
    steps = _pick_num_steps(B, bt_max, bytes_per_batch)
    bt = B // steps                                      # bt * steps == B

    kernel = functools.partial(_se_kernel, inv_hw=1.0 / float(HW))

    cost = pl.CostEstimate(
        flops=2 * B * C * HW + 4 * B * C * hidden,
        transcendentals=0,
        bytes_accessed=2 * B * C * HW * itemsize
        + (w1.size + w2.size + b1.size + b2.size) * 4,
    )

    out_flat = pl.pallas_call(
        kernel,
        out_shape=jax.ShapeDtypeStruct((B, C, HW), x.dtype),
        grid_spec=pltpu.PrefetchScalarGridSpec(
            num_scalar_prefetch=0,
            grid=(steps,),
            in_specs=[
                pl.BlockSpec((bt, C, HW), lambda i: (i, 0, 0)),    # x block
                pl.BlockSpec((C, hidden), lambda i: (0, 0)),       # w1^T (resident)
                pl.BlockSpec((1, hidden), lambda i: (0, 0)),       # b1 (resident)
                pl.BlockSpec((hidden, C), lambda i: (0, 0)),       # w2^T (resident)
                pl.BlockSpec((1, C), lambda i: (0, 0)),            # b2 (resident)
            ],
            out_specs=pl.BlockSpec((bt, C, HW), lambda i: (i, 0, 0)),
        ),
        compiler_params=pltpu.CompilerParams(
            dimension_semantics=("parallel",),
            vmem_limit_bytes=vmem_limit,
        ),
        cost_estimate=cost,
    )(x_flat, w1t, b1_2d, w2t, b2_2d)

    return out_flat.reshape(B, C, H, W)


def se_layer_reference(x, w1, b1, w2, b2):
    """Pure-JAX reference mirroring the PyTorch forward."""
    y = jnp.mean(x, axis=(2, 3))                     # [B, C]
    y = jnp.maximum(y @ w1.T + b1, 0.0)              # [B, hidden]
    y = y @ w2.T + b2                                # [B, C]
    y = jnp.clip(y + 3.0, 0.0, 6.0) / 6.0            # h_sigmoid
    return x * y[:, :, None, None]


if __name__ == "__main__":
    # Small shapes consistent with the module; 14x14 spatial (not a multiple
    # of 128) exercises the no-pad / lane-masked-tail path that the previous
    # version padded around.
    B, C, H, W = 2, 16, 14, 14
    reduction = 4
    hidden = _make_divisible(C // reduction, 8)      # -> 8

    key = jax.random.PRNGKey(0)
    kx, k1, k2, k3, k4 = jax.random.split(key, 5)

    x = jax.random.normal(kx, (B, C, H, W), dtype=jnp.float32)
    # Synthetic parameters (shapes match nn.Linear weights [out, in]).
    w1 = jax.random.normal(k1, (hidden, C), dtype=jnp.float32) * 0.1
    b1 = jax.random.normal(k2, (hidden,), dtype=jnp.float32) * 0.1
    w2 = jax.random.normal(k3, (C, hidden), dtype=jnp.float32) * 0.1
    b2 = jax.random.normal(k4, (C,), dtype=jnp.float32) * 0.1

    ref = se_layer_reference(x, w1, b1, w2, b2)

    # Main (single-pass) path.
    out = se_layer(x, w1, b1, w2, b2)
    out = jax.block_until_ready(out)
    assert out.shape == (B, C, H, W)
    assert jnp.allclose(out, ref, atol=1e-5, rtol=1e-5), "main path mismatch"

    # Also validate the oversized-block fallback (spatial split) by forcing a
    # tiny per-block budget; same numerics expected.
    out_fb = se_layer(x, w1, b1, w2, b2, max_block_bytes=4096)
    out_fb = jax.block_until_ready(out_fb)
    assert jnp.allclose(out_fb, ref, atol=1e-5, rtol=1e-5), "fallback mismatch"

    print("KERNEL_OK")
</pallas_src>

<mosaic_0001>
module attributes {stable_mosaic.version = 11 : i64} {
  func.func @_se_kernel(%arg0: i32, %arg1: memref<1x16x196xf32, #tpu.memory_space<vmem>>, %arg2: memref<16x8xf32, #tpu.memory_space<vmem>>, %arg3: memref<1x8xf32, #tpu.memory_space<vmem>>, %arg4: memref<8x16xf32, #tpu.memory_space<vmem>>, %arg5: memref<1x16xf32, #tpu.memory_space<vmem>>, %arg6: memref<1x16x196xf32, #tpu.memory_space<vmem>>) attributes {dimension_semantics = [#tpu.dimension_semantics<parallel>], iteration_bounds = array<i64: 2>, scalar_prefetch = 0 : i64, scratch_operands = 0 : i64, tpu.core_type = #tpu.core_type<tc>, window_params = [{transform_indices = @transform_0, window_bounds = array<i64: 1, 16, 196>}, {pipeline_mode = #tpu.pipeline_mode<synchronous>, transform_indices = @transform_1, window_bounds = array<i64: 16, 8>}, {pipeline_mode = #tpu.pipeline_mode<synchronous>, transform_indices = @transform_2, window_bounds = array<i64: 1, 8>}, {pipeline_mode = #tpu.pipeline_mode<synchronous>, transform_indices = @transform_3, window_bounds = array<i64: 8, 16>}, {pipeline_mode = #tpu.pipeline_mode<synchronous>, transform_indices = @transform_4, window_bounds = array<i64: 1, 16>}, {transform_indices = @transform_5, window_bounds = array<i64: 1, 16, 196>}]} {
    %c0 = arith.constant 0 : index
    %c0_0 = arith.constant 0 : index
    %c0_1 = arith.constant 0 : index
    %0 = vector.load %arg1[%c0, %c0_0, %c0_1] : memref<1x16x196xf32, #tpu.memory_space<vmem>>, vector<1x16x196xf32>
    %cst = arith.constant dense<0.000000e+00> : vector<1x16xf32>
    %1 = vector.multi_reduction <add>, %0, %cst [2] : vector<1x16x196xf32> to vector<1x16xf32>
    %cst_2 = arith.constant 0.00510204071 : f32
    %2 = vector.broadcast %cst_2 : f32 to vector<1x16xf32>
    %3 = arith.mulf %1, %2 : vector<1x16xf32>
    %c0_3 = arith.constant 0 : index
    %c0_4 = arith.constant 0 : index
    %4 = vector.load %arg2[%c0_3, %c0_4] : memref<16x8xf32, #tpu.memory_space<vmem>>, vector<16x8xf32>
    %cst_5 = arith.constant dense<0.000000e+00> : vector<1x8xf32>
    %5 = tpu.matmul %3, %4, %cst_5 {dimension_numbers = #tpu.dot_dimension_numbers<[1], [0], [0], [1], [0, 0, 1, 1], [], []>} : vector<1x16xf32>, vector<16x8xf32>, vector<1x8xf32> -> vector<1x8xf32>
    %c0_6 = arith.constant 0 : index
    %c0_7 = arith.constant 0 : index
    %6 = vector.load %arg3[%c0_6, %c0_7] : memref<1x8xf32, #tpu.memory_space<vmem>>, vector<1x8xf32>
    %7 = arith.addf %5, %6 : vector<1x8xf32>
    %cst_8 = arith.constant 0.000000e+00 : f32
    %8 = vector.broadcast %cst_8 : f32 to vector<1x8xf32>
    %9 = arith.maximumf %7, %8 : vector<1x8xf32>
    %c0_9 = arith.constant 0 : index
    %c0_10 = arith.constant 0 : index
    %10 = vector.load %arg4[%c0_9, %c0_10] : memref<8x16xf32, #tpu.memory_space<vmem>>, vector<8x16xf32>
    %cst_11 = arith.constant dense<0.000000e+00> : vector<1x16xf32>
    %11 = tpu.matmul %9, %10, %cst_11 {dimension_numbers = #tpu.dot_dimension_numbers<[1], [0], [0], [1], [0, 0, 1, 1], [], []>} : vector<1x8xf32>, vector<8x16xf32>, vector<1x16xf32> -> vector<1x16xf32>
    %c0_12 = arith.constant 0 : index
    %c0_13 = arith.constant 0 : index
    %12 = vector.load %arg5[%c0_12, %c0_13] : memref<1x16xf32, #tpu.memory_space<vmem>>, vector<1x16xf32>
    %13 = arith.addf %11, %12 : vector<1x16xf32>
    %cst_14 = arith.constant 3.000000e+00 : f32
    %14 = vector.broadcast %cst_14 : f32 to vector<1x16xf32>
    %15 = arith.addf %13, %14 : vector<1x16xf32>
    %cst_15 = arith.constant 0.000000e+00 : f32
    %cst_16 = arith.constant 6.000000e+00 : f32
    %16 = vector.broadcast %cst_15 : f32 to vector<1x16xf32>
    %17 = arith.maximumf %16, %15 : vector<1x16xf32>
    %18 = vector.broadcast %cst_16 : f32 to vector<1x16xf32>
    %19 = arith.minimumf %18, %17 : vector<1x16xf32>
    %cst_17 = arith.constant 0.166666672 : f32
    %20 = vector.broadcast %cst_17 : f32 to vector<1x16xf32>
    %21 = arith.mulf %19, %20 : vector<1x16xf32>
    %22 = vector.shape_cast %21 : vector<1x16xf32> to vector<1x16x1xf32>
    %23 = vector.broadcast %22 : vector<1x16x1xf32> to vector<1x16x196xf32>
    %24 = arith.mulf %0, %23 : vector<1x16x196xf32>
    %c0_18 = arith.constant 0 : index
    %c0_19 = arith.constant 0 : index
    %c0_20 = arith.constant 0 : index
    %25 = vector.load %arg6[%c0_18, %c0_19, %c0_20] : memref<1x16x196xf32, #tpu.memory_space<vmem>>, vector<1x16x196xf32>
    tpu.vector_store %arg6[%c0_18, %c0_19, %c0_20], %24 {strides = array<i32>} : memref<1x16x196xf32, #tpu.memory_space<vmem>>, vector<1x16x196xf32>,
    return
  }
  func.func @transform_0(%arg0: i32) -> (i32, i32, i32) {
    %c0_i32 = arith.constant 0 : i32
    %c0_i32_0 = arith.constant 0 : i32
    %c0_i32_1 = arith.constant 0 : i32
    return %arg0, %c0_i32, %c0_i32_0 : i32, i32, i32
  }
  func.func @transform_1(%arg0: i32) -> (i32, i32) {
    %c0_i32 = arith.constant 0 : i32
    %c0_i32_0 = arith.constant 0 : i32
    %c0_i32_1 = arith.constant 0 : i32
    return %c0_i32, %c0_i32_0 : i32, i32
  }
  func.func @transform_2(%arg0: i32) -> (i32, i32) {
    %c0_i32 = arith.constant 0 : i32
    %c0_i32_0 = arith.constant 0 : i32
    %c0_i32_1 = arith.constant 0 : i32
    return %c0_i32, %c0_i32_0 : i32, i32
  }
  func.func @transform_3(%arg0: i32) -> (i32, i32) {
    %c0_i32 = arith.constant 0 : i32
    %c0_i32_0 = arith.constant 0 : i32
    %c0_i32_1 = arith.constant 0 : i32
    return %c0_i32, %c0_i32_0 : i32, i32
  }
  func.func @transform_4(%arg0: i32) -> (i32, i32) {
    %c0_i32 = arith.constant 0 : i32
    %c0_i32_0 = arith.constant 0 : i32
    %c0_i32_1 = arith.constant 0 : i32
    return %c0_i32, %c0_i32_0 : i32, i32
  }
  func.func @transform_5(%arg0: i32) -> (i32, i32, i32) {
    %c0_i32 = arith.constant 0 : i32
    %c0_i32_0 = arith.constant 0 : i32
    %c0_i32_1 = arith.constant 0 : i32
    return %arg0, %c0_i32, %c0_i32_0 : i32, i32, i32
  }
}

</mosaic_0001>

<llo_original>
// kernel: tpu_custom_call.1
$region0: #{tpu_custom_call.1}
  #allocation0 [shape = 'u32[]', space=smem, size = 0x4, offset = 0x4, fixed_abs, tag = 'smem constant byte address 0x4 - core index']
  #allocation1 [shape = 'u32[144,128]{1,0:T(1,128)}', space=vmem, size = 0x12000, scoped, tag = 'internal scratch']
  %s0 = inlined_call_operand.hbm [shape: f32[2,16,196], index: 0, kind: input, shape index: {}]
  %s1 = inlined_call_operand.vmem [shape: f32[16,8], index: 1, kind: input, shape index: {}]
  %s2 = inlined_call_operand.vmem [shape: f32[1,8], index: 2, kind: input, shape index: {}]
  %s3 = inlined_call_operand.vmem [shape: f32[8,16], index: 3, kind: input, shape index: {}]
  %s4 = inlined_call_operand.vmem [shape: f32[1,16], index: 4, kind: input, shape index: {}]
  %s5 = inlined_call_operand.hbm [shape: f32[2,16,196], index: 5, kind: output, shape index: {}]
  %s6 = sld [smem:[#allocation0]]
  $region57: #{tpu_custom_call.1} parent=0
    _
  %s8 = ssub.s32 1, %s6
  %s9 = scalar_select 0, %s8, %s6
  $region1: #{tpu_custom_call.1} parent=0
    #allocation2 [shape = 'u8[32768]{0}', space=vmem, size = 0x8000, scoped, tag = 'input window, operand 0']
    #allocation3 [shape = 's32[2]{0}', space=sflag, size = 0x8, scoped, tag = 'scoped memory for tpu_custom_call.1']
    #allocation4 [shape = 's32[2]{0}', space=sflag, size = 0x8, scoped, tag = 'scoped memory for tpu_custom_call.1']
    #allocation5 [shape = 'u8[32768]{0}', space=vmem, size = 0x8000, scoped, tag = 'output window, operand 0']
    %10 = vsyncpa [#allocation3], 0
    %s11 = scalar_lea.sflag [#allocation3], 1
    %12 = vsyncpa %s11, 0
    %13 = vsyncpa [#allocation4], 0
    %s14 = scalar_lea.sflag [#allocation4], 1
    %15 = vsyncpa %s14, 0
    loop: start=0, step=1, limit=4
    $region2: #{tpu_custom_call.1} parent=1 // loop_pre_header
      _
    $region3: #{tpu_custom_call.1} parent=1 // loop_header
      %s17 = sphi 0, %s21
      %p18 = scmp.ge.s32.totalorder %s17, 4
      %s27 = sphi 0, %s29
      %s30 = sphi 0, %s27
      %s31 = sphi 0, %s30
      %s47 = sphi 0, %s31
      %s51 = sphi 0, %s51
      %s53 = sphi 0, %s51
      %s54 = sphi 0, %s53
      %s68 = sphi 0, %s54
      %s72 = sphi 0, %s72
      %s74 = sphi 0, %s72
      %s75 = sphi 0, %s74
      %s89 = sphi 0, %s75
      %s93 = sphi 0, %s93
      %s95 = sphi 0, %s93
      %s96 = sphi 0, %s95
      %s110 = sphi 0, %s96
      %s114 = sphi 0, %s114
      %s116 = sphi 0, %s114
      %s117 = sphi 0, %s116
      %s131 = sphi 0, %s117
      %s137 = sphi 0, %s139
      %s140 = sphi 0, %s137
      %s141 = sphi 0, %s140
      %s157 = sphi 0, %s141
    $region4: #{tpu_custom_call.1} parent=1 // loop_header_branch
      %20 = sbr.rel (%p18) target = $region8
    $region5: #{tpu_custom_call.1} parent=1 // loop_body
      %s22 = ssub.s32 %s17, 1
      %s23 = ssub.s32 %s17, 2
      %s24 = sadd.s32 %s17, 1
      %s25 = ssub.s32 %s17, %s24
      %p26 = scmp.eq.s32.totalorder %s25, 0
      %s28 = sadd.s32 %s27, 1
      %s29 = scalar_select %p26, %s27, %s28
      %p32 = pneg %p26
      %p33 = scmp.eq.s32.totalorder %s17, 1
      %p34 = por %p32, %p33
      %p35 = scmp.ne.s32.totalorder %s27, %s30
      %p36 = scmp.eq.s32.totalorder %s17, 0
      %p37 = por %p35, %p36
      %p38 = scmp.ne.s32.totalorder %s27, %s30
      %p39 = scmp.eq.s32.totalorder %s22, 1
      %p40 = por %p38, %p39
      %p41 = scmp.ne.s32.totalorder %s30, %s31
      %p42 = scmp.eq.s32.totalorder %s22, 0
      %p43 = por %p41, %p42
      %p44 = scmp.ne.s32.totalorder %s30, %s31
      %p45 = scmp.eq.s32.totalorder %s23, 1
      %p46 = por %p44, %p45
      %p48 = scmp.ne.s32.totalorder %s31, %s47
      %p49 = scmp.eq.s32.totalorder %s23, 0
      %p50 = por %p48, %p49
      %s52 = sadd.s32 %s51, 1
      %p55 = scmp.eq.s32.totalorder %s17, 1
      %p56 = scmp.ne.s32.totalorder %s51, %s53
      %p57 = scmp.eq.s32.totalorder %s17, 0
      %p58 = por %p56, %p57
      %p59 = scmp.ne.s32.totalorder %s51, %s53
      %p60 = scmp.eq.s32.totalorder %s22, 1
      %p61 = por %p59, %p60
      %p62 = scmp.ne.s32.totalorder %s53, %s54
      %p63 = scmp.eq.s32.totalorder %s22, 0
      %p64 = por %p62, %p63
      %p65 = scmp.ne.s32.totalorder %s53, %s54
      %p66 = scmp.eq.s32.totalorder %s23, 1
      %p67 = por %p65, %p66
      %p69 = scmp.ne.s32.totalorder %s54, %s68
      %p70 = scmp.eq.s32.totalorder %s23, 0
      %p71 = por %p69, %p70
      %s73 = sadd.s32 %s72, 1
      %p76 = scmp.eq.s32.totalorder %s17, 1
      %p77 = scmp.ne.s32.totalorder %s72, %s74
      %p78 = scmp.eq.s32.totalorder %s17, 0
      %p79 = por %p77, %p78
      %p80 = scmp.ne.s32.totalorder %s72, %s74
      %p81 = scmp.eq.s32.totalorder %s22, 1
      %p82 = por %p80, %p81
      %p83 = scmp.ne.s32.totalorder %s74, %s75
      %p84 = scmp.eq.s32.totalorder %s22, 0
      %p85 = por %p83, %p84
      %p86 = scmp.ne.s32.totalorder %s74, %s75
      %p87 = scmp.eq.s32.totalorder %s23, 1
      %p88 = por %p86, %p87
      %p90 = scmp.ne.s32.totalorder %s75, %s89
      %p91 = scmp.eq.s32.totalorder %s23, 0
      %p92 = por %p90, %p91
      %s94 = sadd.s32 %s93, 1
      %p97 = scmp.eq.s32.totalorder %s17, 1
      %p98 = scmp.ne.s32.totalorder %s93, %s95
      %p99 = scmp.eq.s32.totalorder %s17, 0
      %p100 = por %p98, %p99
      %p101 = scmp.ne.s32.totalorder %s93, %s95
      %p102 = scmp.eq.s32.totalorder %s22, 1
      %p103 = por %p101, %p102
      %p104 = scmp.ne.s32.totalorder %s95, %s96
      %p105 = scmp.eq.s32.totalorder %s22, 0
      %p106 = por %p104, %p105
      %p107 = scmp.ne.s32.totalorder %s95, %s96
      %p108 = scmp.eq.s32.totalorder %s23, 1
      %p109 = por %p107, %p108
      %p111 = scmp.ne.s32.totalorder %s96, %s110
      %p112 = scmp.eq.s32.totalorder %s23, 0
      %p113 = por %p111, %p112
      %s115 = sadd.s32 %s114, 1
      %p118 = scmp.eq.s32.totalorder %s17, 1
      %p119 = scmp.ne.s32.totalorder %s114, %s116
      %p120 = scmp.eq.s32.totalorder %s17, 0
      %p121 = por %p119, %p120
      %p122 = scmp.ne.s32.totalorder %s114, %s116
      %p123 = scmp.eq.s32.totalorder %s22, 1
      %p124 = por %p122, %p123
      %p125 = scmp.ne.s32.totalorder %s116, %s117
      %p126 = scmp.eq.s32.totalorder %s22, 0
      %p127 = por %p125, %p126
      %p128 = scmp.ne.s32.totalorder %s116, %s117
      %p129 = scmp.eq.s32.totalorder %s23, 1
      %p130 = por %p128, %p129
      %p132 = scmp.ne.s32.totalorder %s117, %s131
      %p133 = scmp.eq.s32.totalorder %s23, 0
      %p134 = por %p132, %p133
      %s135 = ssub.s32 %s17, %s24
      %p136 = scmp.eq.s32.totalorder %s135, 0
      %s138 = sadd.s32 %s137, 1
      %s139 = scalar_select %p136, %s137, %s138
      %p142 = pneg %p136
      %p143 = scmp.eq.s32.totalorder %s17, 1
      %p144 = por %p142, %p143
      %p145 = scmp.ne.s32.totalorder %s137, %s140
      %p146 = scmp.eq.s32.totalorder %s17, 0
      %p147 = por %p145, %p146
      %p148 = scmp.ne.s32.totalorder %s137, %s140
      %p149 = scmp.eq.s32.totalorder %s22, 1
      %p150 = por %p148, %p149
      %p151 = scmp.ne.s32.totalorder %s140, %s141
      %p152 = scmp.eq.s32.totalorder %s22, 0
      %p153 = por %p151, %p152
      %p154 = scmp.ne.s32.totalorder %s140, %s141
      %p155 = scmp.eq.s32.totalorder %s23, 1
      %p156 = por %p154, %p155
      %p158 = scmp.ne.s32.totalorder %s141, %s157
      %p159 = scmp.eq.s32.totalorder %s23, 0
      %p160 = por %p158, %p159
      %p161 = scmp.le.s32.totalorder 1, %s17
      %p162 = scmp.lt.s32.totalorder %s17, 3
      %p163 = pnand %p161, %p162
      %p164 = pneg %p163
      // Predicated region
      $region9: #{tpu_custom_call.1} parent=5 // pred_check
        _
      $region10: #{tpu_custom_call.1} parent=5 // pred_check_branch
        %166 = sbr.rel (%p163) target = $region12
      $region11: #{tpu_custom_call.1} parent=5 // pred_region
        %s167 = ssub.s32 %s17, 1
        // Predicated region
        $region13: #{tpu_custom_call.1} parent=11 // pred_check
          %p168 = pneg %p64
        $region14: #{tpu_custom_call.1} parent=11 // pred_check_branch
          %170 = sbr.rel (%p168) target = $region16
        $region15: #{tpu_custom_call.1} parent=11 // pred_region
          _
        $region16: #{tpu_custom_call.1} parent=11 // pred_fallthru
          _
        // Predicated region
        $region17: #{tpu_custom_call.1} parent=11 // pred_check
          %p171 = pneg %p85
        $region18: #{tpu_custom_call.1} parent=11 // pred_check_branch
          %173 = sbr.rel (%p171) target = $region20
        $region19: #{tpu_custom_call.1} parent=11 // pred_region
          _
        $region20: #{tpu_custom_call.1} parent=11 // pred_fallthru
          _
        // Predicated region
        $region21: #{tpu_custom_call.1} parent=11 // pred_check
          %p174 = pneg %p106
        $region22: #{tpu_custom_call.1} parent=11 // pred_check_branch
          %176 = sbr.rel (%p174) target = $region24
        $region23: #{tpu_custom_call.1} parent=11 // pred_region
          _
        $region24: #{tpu_custom_call.1} parent=11 // pred_fallthru
          _
        // Predicated region
        $region25: #{tpu_custom_call.1} parent=11 // pred_check
          %p177 = pneg %p127
        $region26: #{tpu_custom_call.1} parent=11 // pred_check_branch
          %179 = sbr.rel (%p177) target = $region28
        $region27: #{tpu_custom_call.1} parent=11 // pred_region
          _
        $region28: #{tpu_custom_call.1} parent=11 // pred_fallthru
          _
      $region12: #{tpu_custom_call.1} parent=5 // pred_fallthru
        _
      %p180 = scmp.lt.s32.totalorder %s17, 2
      // Predicated region
      $region29: #{tpu_custom_call.1} parent=5 // pred_check
        %p181 = pneg %p180
      $region30: #{tpu_custom_call.1} parent=5 // pred_check_branch
        %183 = sbr.rel (%p181) target = $region32
      $region31: #{tpu_custom_call.1} parent=5 // pred_region
        // Predicated region
        $region33: #{tpu_custom_call.1} parent=31 // pred_check
          %p184 = pneg %p37
        $region34: #{tpu_custom_call.1} parent=31 // pred_check_branch
          %186 = sbr.rel (%p184) target = $region36
        $region35: #{tpu_custom_call.1} parent=31 // pred_region
          %s187 = sand.u32 %s27, 1
          %s188 = scalar_lea.sflag [#allocation3], %s187
          %s189 = sand.u32 %s27, 1
          %s190 = smul.addr %s189, 32
          %s191 = scalar_lea.vmem [#allocation2], %s190
          %s193 = ssub.s32 512, 512
          %194 = vsyncadd %s188, %s193
          %s195 = smul.addr %s17, 4
          %s196 = smul.addr %s195, 128
          %s197 = scalar_lea.hbm %s0, %s196
          %s198 = sshll.u32 %s191, 4
          %s199 = int_to_ptr.vmem [resolvable:$true] %s198
          %204 = dma.hbm_to_vmem [thread:$0]  %s197, 512, %s199, %s188, 256, 256, 16
        $region36: #{tpu_custom_call.1} parent=31 // pred_fallthru
          _
      $region32: #{tpu_custom_call.1} parent=5 // pred_fallthru
        _
      %p205 = scmp.le.s32.totalorder 1, %s17
      %p206 = scmp.lt.s32.totalorder %s17, 3
      %p207 = pnand %p205, %p206
      %p208 = pneg %p207
      // Predicated region
      $region37: #{tpu_custom_call.1} parent=5 // pred_check
        _
      $region38: #{tpu_custom_call.1} parent=5 // pred_check_branch
        %210 = sbr.rel (%p207) target = $region40
      $region39: #{tpu_custom_call.1} parent=5 // pred_region
        %s211 = ssub.s32 %s17, 1
        %s212 = sand.u32 %s30, 1
        %s213 = scalar_lea.sflag [#allocation3], %s212
        %s214 = sand.u32 %s30, 1
        %s215 = smul.addr %s214, 32
        %s216 = scalar_lea.vmem [#allocation2], %s215
        // Predicated region
        $region41: #{tpu_custom_call.1} parent=39 // pred_check
          %p217 = pneg %p43
        $region42: #{tpu_custom_call.1} parent=39 // pred_check_branch
          %219 = sbr.rel (%p217) target = $region44
        $region43: #{tpu_custom_call.1} parent=39 // pred_region
          %220 = dma.done %s213, 512
        $region44: #{tpu_custom_call.1} parent=39 // pred_fallthru
          _
        %s221 = sand.u32 %s30, 1
        %s222 = scalar_lea.sflag [#allocation3], %s221
        %s223 = sand.u32 %s30, 1
        %s224 = smul.addr %s223, 32
        %s225 = scalar_lea.vmem [#allocation2], %s224
        %p226 = pneg %p43
        %p227 = pneg %p40
        %p228 = pneg %p64
        %p229 = pneg %p61
        %p230 = pneg %p85
        %p231 = pneg %p82
        %p232 = pneg %p106
        %p233 = pneg %p103
        %p234 = pneg %p127
        %p235 = pneg %p124
        %p236 = pneg %p153
        %p237 = pneg %p150
        %s238 = sand.u32 %s140, 1
        %s239 = scalar_lea.sflag [#allocation4], %s238
        %s240 = sand.u32 %s140, 1
        %s241 = smul.addr %s240, 32
        %s242 = scalar_lea.vmem [#allocation5], %s241
        %v243 = vld [vmem:[%s216] sm:$0xff]
        %v244 = vld [vmem:[%s216 + $0x8] sm:$0xff]
        %v245 = vld [vmem:[%s216 + $0x10] sm:$0xff]
        %v246 = vld [vmem:[%s216 + $0x18] sm:$0xff]
        %vm247 = vcmask 556032
        %v248 = vsel %vm247, %v244, 0.0
        %v249 = vadd.f32 %v243, %v248
        %250 = vadd.xlane.f32.xlu0 %v249
        %v251 = vpop.xlane.xlu0 %250
        %v252 = vsel %vm247, %v246, 0.0
        %v253 = vadd.f32 %v245, %v252
        %254 = vadd.xlane.f32.xlu0 %v253
        %v255 = vpop.xlane.xlu0 %254
        %v256 = vmul.f32 %v251, 0.0051020407
        %v257 = vmul.f32 %v255, 0.0051020407
        %v258 = vld [vmem:[%s1] sm:$0xff]
        %v259 = vld [vmem:[%s1 + $0x8] sm:$0xff]
        %v260 = vld [vmem:[%s2] sm:$0x1]
        %v263 = vlaneseq
        %v264 = vand.u32 %v263, 127
        %v265 = vlaneseq
        %v266 = vshrl.u32 %v265, 7
        %v267 = vsub.s32 %v264, %v266
        %v268 = vrot.slane %v256, %v267
        %v269 = vadd.s32 %v264, 4294967288
        %v270 = vlaneseq
        %v271 = vshrl.u32 %v270, 7
        %v272 = vsub.s32 %v269, %v271
        %v273 = vrot.slane %v257, %v272
        %vm274 = vcmask 130112
        %v275 = vsel %vm274, %v273, %v268
        %vm276 = vcmask 130048
        %v277 = vsel %vm276, %v275, 0
        %279 = vmatprep.subr.mxu0 0.0
        %280 = vmatpush1.msra.mxu0 0.0
        %281 = vmatprep.subr.mxu0 0.0
        %282 = vmatpush1.msra.mxu0 0.0
        %283 = vmatprep.subr.mxu0 0.0
        %284 = vmatpush1.msra.mxu0 0.0
        %285 = vmatprep.subr.mxu0 0.0
        %286 = vmatpush1.msra.mxu0 0.0
        %287 = vmatprep.subr.mxu0 0.0
        %288 = vmatpush1.msra.mxu0 0.0
        %289 = vmatprep.subr.mxu0 0.0
        %290 = vmatpush1.msra.mxu0 0.0
        %291 = vmatprep.subr.mxu0 0.0
        %292 = vmatpush1.msra.mxu0 0.0
        %293 = vmatprep.subr.mxu0 0.0
        %294 = vmatpush1.msra.mxu0 0.0
        %295 = vmatprep.subr.mxu0 0.0
        %296 = vmatpush1.msra.mxu0 0.0
        %297 = vmatprep.subr.mxu0 0.0
        %298 = vmatpush1.msra.mxu0 0.0
        %299 = vmatprep.subr.mxu0 0.0
        %300 = vmatpush1.msra.mxu0 0.0
        %301 = vmatprep.subr.mxu0 0.0
        %302 = vmatpush1.msra.mxu0 0.0
        %303 = vmatprep.subr.mxu0 0.0
        %304 = vmatpush1.msra.mxu0 0.0
        %305 = vmatprep.subr.mxu0 0.0
        %306 = vmatpush1.msra.mxu0 0.0
        %307 = vmatprep.subr.mxu0 0.0
        %308 = vmatpush1.msra.mxu0 %v259
        %309 = vmatprep.subr.mxu0 0.0
        %310 = vmatpush1.msra.mxu0 %v258
        %311 = vmatprep.subr.mxu0 0.0
        %312 = vmatpush2.msra.mxu0 0.0
        %313 = vmatprep.subr.mxu0 0.0
        %314 = vmatpush2.msra.mxu0 0.0
        %315 = vmatprep.subr.mxu0 0.0
        %316 = vmatpush2.msra.mxu0 0.0
        %317 = vmatprep.subr.mxu0 0.0
        %318 = vmatpush2.msra.mxu0 0.0
        %319 = vmatprep.subr.mxu0 0.0
        %320 = vmatpush2.msra.mxu0 0.0
        %321 = vmatprep.subr.mxu0 0.0
        %322 = vmatpush2.msra.mxu0 0.0
        %323 = vmatprep.subr.mxu0 0.0
        %324 = vmatpush2.msra.mxu0 0.0
        %325 = vmatprep.subr.mxu0 0.0
        %326 = vmatpush2.msra.mxu0 0.0
        %327 = vmatprep.subr.mxu0 0.0
        %328 = vmatpush2.msra.mxu0 0.0
        %329 = vmatprep.subr.mxu0 0.0
        %330 = vmatpush2.msra.mxu0 0.0
        %331 = vmatprep.subr.mxu0 0.0
        %332 = vmatpush2.msra.mxu0 0.0
        %333 = vmatprep.subr.mxu0 0.0
        %334 = vmatpush2.msra.mxu0 0.0
        %335 = vmatprep.subr.mxu0 0.0
        %336 = vmatpush2.msra.mxu0 0.0
        %337 = vmatprep.subr.mxu0 0.0
        %338 = vmatpush2.msra.mxu0 0.0
        %339 = vmatprep.subr.mxu0 0.0
        %340 = vmatpush2.msra.mxu0 0.0
        %341 = vmatprep.subr.mxu0 0.0
        %342 = vmatpush2.msra.mxu0 0.0
        %343 = vmatprep.mubr.f32.mxu0 0.0
        %344 = vmatmul.mubr.f32.gmra.mxu0 %v277
        %v345 = vpop.f32.mrf.mxu0
        %v346 = vadd.f32 %v260, %v345
        %v347 = vpop.f32.mrf.mxu0
        %348 = vdwg.mxu0
        %v349 = vmax.f32 %v346, 0.0
        %v350 = vld [vmem:[%s3] sm:$0xff]
        %v351 = vld [vmem:[%s4] sm:$0x1]
        %vm352 = vcmask 64512
        %v354 = vsel %vm352, %v349, 0
        %356 = vmatprep.subr.mxu0 0.0
        %357 = vmatpush1.msra.mxu0 0.0
        %358 = vmatprep.subr.mxu0 0.0
        %359 = vmatpush1.msra.mxu0 0.0
        %360 = vmatprep.subr.mxu0 0.0
        %361 = vmatpush1.msra.mxu0 0.0
        %362 = vmatprep.subr.mxu0 0.0
        %363 = vmatpush1.msra.mxu0 0.0
        %364 = vmatprep.subr.mxu0 0.0
        %365 = vmatpush1.msra.mxu0 0.0
        %366 = vmatprep.subr.mxu0 0.0
        %367 = vmatpush1.msra.mxu0 0.0
        %368 = vmatprep.subr.mxu0 0.0
        %369 = vmatpush1.msra.mxu0 0.0
        %370 = vmatprep.subr.mxu0 0.0
        %371 = vmatpush1.msra.mxu0 0.0
        %372 = vmatprep.subr.mxu0 0.0
        %373 = vmatpush1.msra.mxu0 0.0
        %374 = vmatprep.subr.mxu0 0.0
        %375 = vmatpush1.msra.mxu0 0.0
        %376 = vmatprep.subr.mxu0 0.0
        %377 = vmatpush1.msra.mxu0 0.0
        %378 = vmatprep.subr.mxu0 0.0
        %379 = vmatpush1.msra.mxu0 0.0
        %380 = vmatprep.subr.mxu0 0.0
        %381 = vmatpush1.msra.mxu0 0.0
        %382 = vmatprep.subr.mxu0 0.0
        %383 = vmatpush1.msra.mxu0 0.0
        %384 = vmatprep.subr.mxu0 0.0
        %385 = vmatpush1.msra.mxu0 0.0
        %386 = vmatprep.subr.mxu0 0.0
        %387 = vmatpush1.msra.mxu0 %v350
        %388 = vmatprep.subr.mxu0 0.0
        %389 = vmatpush2.msra.mxu0 0.0
        %390 = vmatprep.subr.mxu0 0.0
        %391 = vmatpush2.msra.mxu0 0.0
        %392 = vmatprep.subr.mxu0 0.0
        %393 = vmatpush2.msra.mxu0 0.0
        %394 = vmatprep.subr.mxu0 0.0
        %395 = vmatpush2.msra.mxu0 0.0
        %396 = vmatprep.subr.mxu0 0.0
        %397 = vmatpush2.msra.mxu0 0.0
        %398 = vmatprep.subr.mxu0 0.0
        %399 = vmatpush2.msra.mxu0 0.0
        %400 = vmatprep.subr.mxu0 0.0
        %401 = vmatpush2.msra.mxu0 0.0
        %402 = vmatprep.subr.mxu0 0.0
        %403 = vmatpush2.msra.mxu0 0.0
        %404 = vmatprep.subr.mxu0 0.0
        %405 = vmatpush2.msra.mxu0 0.0
        %406 = vmatprep.subr.mxu0 0.0
        %407 = vmatpush2.msra.mxu0 0.0
        %408 = vmatprep.subr.mxu0 0.0
        %409 = vmatpush2.msra.mxu0 0.0
        %410 = vmatprep.subr.mxu0 0.0
        %411 = vmatpush2.msra.mxu0 0.0
        %412 = vmatprep.subr.mxu0 0.0
        %413 = vmatpush2.msra.mxu0 0.0
        %414 = vmatprep.subr.mxu0 0.0
        %415 = vmatpush2.msra.mxu0 0.0
        %416 = vmatprep.subr.mxu0 0.0
        %417 = vmatpush2.msra.mxu0 0.0
        %418 = vmatprep.subr.mxu0 0.0
        %419 = vmatpush2.msra.mxu0 0.0
        %420 = vmatprep.mubr.f32.mxu0 0.0
        %421 = vmatmul.mubr.f32.gmra.mxu0 %v354
        %v422 = vpop.f32.mrf.mxu0
        %v423 = vadd.f32 %v351, %v422
        %v424 = vpop.f32.mrf.mxu0
        %425 = vdwg.mxu0
        %v426 = vadd.f32 %v423, 3.0
        %v427 = vmax.f32 %v426, 0.0
        %v428 = vmin.f32 %v427, 6.0
        %v429 = vmul.f32 %v428, 0.16666667
        %v430 = vlaneseq
        %v431 = vshrl.u32 %v430, 7
        %v432 = vsub.s32 0, %v431
        %v433 = vrot.slane %v429, %v432
        %435 = vbcast.lane.b32.xlu0 %v433, 256
        %v436 = vpop.permute.xlu0 %435
        %s438 = sor.u32 256, 8
        %439 = vbcast.lane.b32.xlu0 %v433, %s438
        %v440 = vpop.permute.xlu0 %439
        %v441 = vmul.f32 %v243, %v436
        %v442 = vmul.f32 %v244, %v436
        %v443 = vmul.f32 %v245, %v440
        %v444 = vmul.f32 %v246, %v440
        %445 = vst [vmem:[%s242] sm:$0xff] %v441
        %446 = vst.msk [vmem:[%s242 + $0x8] sm:$0xff] %vm247, %v442
        %447 = vst [vmem:[%s242 + $0x10] sm:$0xff] %v443
        %448 = vst.msk [vmem:[%s242 + $0x18] sm:$0xff] %vm247, %v444
        %s449 = sand.u32 %s140, 1
        %s450 = scalar_lea.sflag [#allocation4], %s449
        %s451 = sand.u32 %s140, 1
        %s452 = smul.addr %s451, 32
        %s453 = scalar_lea.vmem [#allocation5], %s452
        // Predicated region
        $region45: #{tpu_custom_call.1} parent=39 // pred_check
          %p454 = pneg %p150
        $region46: #{tpu_custom_call.1} parent=39 // pred_check_branch
          %456 = sbr.rel (%p454) target = $region48
        $region47: #{tpu_custom_call.1} parent=39 // pred_region
          %s458 = ssub.s32 512, 512
          %459 = vsyncadd %s450, %s458
          %s460 = smul.addr %s22, 4
          %s461 = smul.addr %s460, 128
          %s462 = scalar_lea.hbm %s5, %s461
          %s463 = sshll.u32 %s453, 4
          %s464 = int_to_ptr.vmem [resolvable:$true] %s463
          %469 = dma.vmem_to_hbm [thread:$0]  %s464, 512, %s462, %s450, 256, 256, 16
        $region48: #{tpu_custom_call.1} parent=39 // pred_fallthru
          _
      $region40: #{tpu_custom_call.1} parent=5 // pred_fallthru
        _
      %p470 = scmp.le.s32.totalorder 2, %s17
      // Predicated region
      $region49: #{tpu_custom_call.1} parent=5 // pred_check
        %p471 = pneg %p470
      $region50: #{tpu_custom_call.1} parent=5 // pred_check_branch
        %473 = sbr.rel (%p471) target = $region52
      $region51: #{tpu_custom_call.1} parent=5 // pred_region
        %s474 = ssub.s32 %s17, 2
        // Predicated region
        $region53: #{tpu_custom_call.1} parent=51 // pred_check
          %p475 = pneg %p156
        $region54: #{tpu_custom_call.1} parent=51 // pred_check_branch
          %477 = sbr.rel (%p475) target = $region56
        $region55: #{tpu_custom_call.1} parent=51 // pred_region
          %s478 = sand.u32 %s141, 1
          %s479 = scalar_lea.sflag [#allocation4], %s478
          %s480 = sand.u32 %s141, 1
          %s481 = smul.addr %s480, 32
          %s482 = scalar_lea.vmem [#allocation5], %s481
          %483 = dma.done %s479, 512
        $region56: #{tpu_custom_call.1} parent=51 // pred_fallthru
          _
      $region52: #{tpu_custom_call.1} parent=5 // pred_fallthru
        _
    $region6: #{tpu_custom_call.1} parent=1 // loop_footer
      %s21 = sadd.s32 1, %s17
    $region7: #{tpu_custom_call.1} parent=1 // loop_footer_branch
      %16 = sbr.rel target = $region3
    $region8: #{tpu_custom_call.1} parent=1 // loop_exit
      _
    %484 = vsyncpa [#allocation3], 1
    %s485 = scalar_lea.sflag [#allocation3], 1
    %486 = vsyncpa %s485, 1
    %487 = vsyncpa [#allocation4], 1
    %s488 = scalar_lea.sflag [#allocation4], 1
    %489 = vsyncpa %s488, 1

</llo_original>
